<compile_context>
chip_gen: v5e
topology: v5e:2x2
jax: 0.10.0
libtpu: 0.0.40
codegen_flags: <defaults>
</compile_context>

<pallas_src>
import jax
import jax.numpy as jnp
from jax.experimental import pallas as pl
from jax.experimental.pallas import tpu as pltpu

HIDDEN = 256
SLAB = 128             # lane-dense packed width for [ns | r | a | zeros]
OUT_W = HIDDEN + SLAB  # 384 = [ l | packed slab ]


# ----------------------------------------------------------------------------
# Kernel
# ----------------------------------------------------------------------------
def _encoder_decoder_kernel(
    sa_ref,                          # (TB, S+A)  f32
    w_e1, b_e1,                      # (S+A, 256) bf16, (1, 256) f32
    w_e2, b_e2,                      # (256, 256) bf16, (1, 256) f32
    w_cat, b_heads,                  # (256, 640) bf16, (1, 512) f32
    w2, b2,                          # (512, 128) bf16, (1, 128) f32
    out_ref,                         # (TB, 384)  f32 : [ l | ns | r | a | 0 ]
):
    f32, bf16 = jnp.float32, jnp.bfloat16

    # ---- encoder (bf16 operands, f32 accumulate / bias / ReLU) --------------
    x = sa_ref[...].astype(bf16)
    h = jnp.dot(x, w_e1[...], preferred_element_type=f32) + b_e1[...]
    h = jnp.maximum(h, 0.0)
    l = jnp.dot(h.astype(bf16), w_e2[...], preferred_element_type=f32) + b_e2[...]
    l = jnp.maximum(l, 0.0)

    # ---- fused heads: one MXU pass for d1 / a1 / r1 --------------------------
    # hc columns: [0:256) d1 pre-act | [256:512) a1 pre-act | [512:640) reward
    hc = jnp.dot(l.astype(bf16), w_cat[...], preferred_element_type=f32)
    hd = jnp.maximum(hc[:, : 2 * HIDDEN] + b_heads[...], 0.0)   # 512-aligned slice
    r_block = hc[:, 2 * HIDDEN:]                                 # (TB, 128)

    # w2 is block-diagonal (d2 -> ns columns, a2 -> a columns); r_block already
    # holds the reward in its packed column (its other columns are exactly 0).
    slab = (jnp.dot(hd.astype(bf16), w2[...], preferred_element_type=f32)
            + r_block + b2[...])

    # Two 128-lane-aligned stores into the single lane-dense output slab.
    out_ref[:, :HIDDEN] = l.astype(out_ref.dtype)
    out_ref[:, HIDDEN:] = slab.astype(out_ref.dtype)


# ----------------------------------------------------------------------------
# Weight packing (done once, outside the hot path)
# ----------------------------------------------------------------------------
def pack_params(p, state_dim, action_dim):
    S, A, H = state_dim, action_dim, HIDDEN
    assert S + 1 + A <= SLAB, "packed output slab requires S + 1 + A <= 128"
    bf16, f32 = jnp.bfloat16, jnp.float32

    # Fused l-consumers: [w_d1 | w_a1 | reward block].  The single reward
    # column is placed at lane 512 + S so it lands in its packed-slab slot.
    r_block = jnp.zeros((H, SLAB), f32).at[:, S].set(p["w_r1"][:, 0])
    w_cat = jnp.concatenate([p["w_d1"], p["w_a1"], r_block], axis=1)   # (256, 640)
    b_heads = jnp.concatenate([p["b_d1"], p["b_a1"]], axis=1)          # (1, 512)

    # Block-diagonal second-layer head weight producing the packed slab
    # [ns (0:S) | r (S) | a (S+1:S+1+A) | zeros].
    w2 = jnp.zeros((2 * H, SLAB), f32)
    w2 = w2.at[:H, :S].set(p["w_d2"])
    w2 = w2.at[H:, S + 1:S + 1 + A].set(p["w_a2"])
    b2 = jnp.zeros((1, SLAB), f32)
    b2 = b2.at[:, :S].set(p["b_d2"])
    b2 = b2.at[:, S + 1:S + 1 + A].set(p["b_a2"])

    return {
        "w_e1": p["w_e1"].astype(bf16),  "b_e1": p["b_e1"].astype(f32),
        "w_e2": p["w_e2"].astype(bf16),  "b_e2": p["b_e2"].astype(f32),
        "w_cat": w_cat.astype(bf16),     "b_heads": b_heads.astype(f32),
        "w2": w2.astype(bf16),           "b2": b2.astype(f32),
    }


# ----------------------------------------------------------------------------
# Batch tiling plan + forward wrapper
# ----------------------------------------------------------------------------
def _plan_batch(batch, cap=1024):
    """Pick (tile_b, padded_B): tile is a multiple of 8 (<= cap), shrunk until
    the grid has >= 2 steps when possible (keeps both v7x TCs busy); batch is
    padded up to a tile multiple so tile choice is a pure perf knob."""
    tile = cap
    while tile > 8 and pl.cdiv(batch, tile) < 2:
        tile //= 2
    padded = pl.cdiv(batch, tile) * tile
    return tile, padded


def encoder_decoder_forward(state, action, packed, *, tile_b=None):
    """state: (B, S), action: (B, A), packed: pack_params(...) -> (ns, r, a, l)."""
    B, S = state.shape
    A = action.shape[1]

    if tile_b is None:
        tile_b, padded_b = _plan_batch(B)
    else:
        padded_b = pl.cdiv(B, tile_b) * tile_b

    # Single concatenated input => one fused K=(S+A) first-layer matmul.
    sa = jnp.concatenate(
        [state.astype(jnp.float32), action.astype(jnp.float32)], axis=1)
    if padded_b != B:
        sa = jnp.pad(sa, ((0, padded_b - B), (0, 0)))

    grid = (padded_b // tile_b,)

    def batch_tiled(last):
        return pl.BlockSpec((tile_b, last), lambda i: (i, 0))

    def resident(arr):
        # TODO(synk): pipeline_mode=pl.Buffered(1) would drop the dead second
        # buffer of these constant-index weights (~0.6 MB bf16); left at the
        # default for maximal portability since the cost is negligible.
        return pl.BlockSpec(arr.shape, lambda i: (0, 0))

    weight_order = ("w_e1", "b_e1", "w_e2", "b_e2",
                    "w_cat", "b_heads", "w2", "b2")
    weights = [packed[k] for k in weight_order]

    out = pl.pallas_call(
        _encoder_decoder_kernel,
        grid=grid,
        in_specs=[batch_tiled(S + A)] + [resident(w) for w in weights],
        out_specs=batch_tiled(OUT_W),
        out_shape=jax.ShapeDtypeStruct((padded_b, OUT_W), jnp.float32),
        compiler_params=pltpu.CompilerParams(
            dimension_semantics=("parallel",),
            # weights (~1.2 MB double-buffered bf16) + 2x (TB,20)+(TB,384) f32
            # I/O tiles + ~10 KB/row of f32 intermediates: <16 MB at TB=1024.
            vmem_limit_bytes=64 * 1024 * 1024,
        ),
    )(sa, *weights)

    # TODO(synk): emit bf16 outputs if downstream tolerates it (halves the
    # dominant HBM-writeback term on v5e/v6e).
    l = out[:B, :HIDDEN]
    slab = out[:B, HIDDEN:]
    ns = slab[:, :S]
    r = slab[:, S:S + 1]
    a = slab[:, S + 1:S + 1 + A]
    return ns, r, a, l


# ----------------------------------------------------------------------------
# Parameter init + references
# ----------------------------------------------------------------------------
def init_params(key, state_dim, action_dim):
    """Deterministic synthetic init (shapes/init match the PyTorch defaults)."""
    ks = jax.random.split(key, 13)

    def lin(kw, fan_in, fan_out):
        bound = 1.0 / jnp.sqrt(jnp.float32(fan_in))
        return jax.random.uniform(kw, (fan_in, fan_out), jnp.float32, -bound, bound)

    def bias(kb, fan_in, fan_out):
        bound = 1.0 / jnp.sqrt(jnp.float32(fan_in))
        return jax.random.uniform(kb, (1, fan_out), jnp.float32, -bound, bound)

    sa = state_dim + action_dim
    return {
        "w_e1": lin(ks[0], sa, HIDDEN),     "b_e1": bias(ks[1], sa, HIDDEN),
        "w_e2": lin(ks[2], HIDDEN, HIDDEN), "b_e2": bias(ks[3], HIDDEN, HIDDEN),
        "w_r1": lin(ks[4], HIDDEN, 1),
        "w_a1": lin(ks[5], HIDDEN, HIDDEN), "b_a1": bias(ks[6], HIDDEN, HIDDEN),
        "w_a2": lin(ks[7], HIDDEN, action_dim),
        "b_a2": bias(ks[8], HIDDEN, action_dim),
        "w_d1": lin(ks[9], HIDDEN, HIDDEN), "b_d1": bias(ks[10], HIDDEN, HIDDEN),
        "w_d2": lin(ks[11], HIDDEN, state_dim),
        "b_d2": bias(ks[12], HIDDEN, state_dim),
    }


def reference_forward_f32(state, action, p):
    """Plain-JAX f32 reference reproducing the PyTorch forward semantics."""
    x = jnp.concatenate([state, action], axis=1)
    l = jax.nn.relu(x @ p["w_e1"] + p["b_e1"])
    l = jax.nn.relu(l @ p["w_e2"] + p["b_e2"])
    r = l @ p["w_r1"]
    d = jax.nn.relu(l @ p["w_d1"] + p["b_d1"])
    ns = d @ p["w_d2"] + p["b_d2"]
    d = jax.nn.relu(l @ p["w_a1"] + p["b_a1"])
    a = d @ p["w_a2"] + p["b_a2"]
    return ns, r, a, l


def reference_forward_bf16(state, action, p):
    """Reference with the same bf16-operand / f32-accumulate matmul recipe."""
    bf16, f32 = jnp.bfloat16, jnp.float32

    def mm(x, w):
        return jnp.dot(x.astype(bf16), w.astype(bf16), preferred_element_type=f32)

    x = jnp.concatenate([state, action], axis=1)
    l = jax.nn.relu(mm(x, p["w_e1"]) + p["b_e1"])
    l = jax.nn.relu(mm(l, p["w_e2"]) + p["b_e2"])
    r = mm(l, p["w_r1"])
    d = jax.nn.relu(mm(l, p["w_d1"]) + p["b_d1"])
    ns = mm(d, p["w_d2"]) + p["b_d2"]
    d = jax.nn.relu(mm(l, p["w_a1"]) + p["b_a1"])
    a = mm(d, p["w_a2"]) + p["b_a2"]
    return ns, r, a, l


# ----------------------------------------------------------------------------
if __name__ == "__main__":
    state_dim, action_dim, batch = 16, 4, 8

    key = jax.random.PRNGKey(0)
    k_state, k_action, k_params = jax.random.split(key, 3)

    state = jax.random.normal(k_state, (batch, state_dim), jnp.float32)
    action = jax.random.normal(k_action, (batch, action_dim), jnp.float32)
    params = init_params(k_params, state_dim, action_dim)
    packed = jax.tree_util.tree_map(
        jax.block_until_ready, pack_params(params, state_dim, action_dim))

    ns, r, a, l = jax.block_until_ready(
        encoder_decoder_forward(state, action, packed))

    assert ns.shape == (batch, state_dim)
    assert r.shape == (batch, 1)
    assert a.shape == (batch, action_dim)
    assert l.shape == (batch, HIDDEN)

    # Tight check against a reference using the same bf16-operand matmul recipe.
    for got, want in zip((ns, r, a, l),
                         reference_forward_bf16(state, action, params)):
        assert jnp.allclose(got, want, atol=1e-2, rtol=1e-2)

    # Loose sanity check against the pure-f32 PyTorch-equivalent reference
    # (bf16 matmul operands introduce ~1% relative error).
    for got, want in zip((ns, r, a, l),
                         reference_forward_f32(state, action, params)):
        assert jnp.allclose(got, want, atol=1e-1, rtol=1e-1)

    print("KERNEL_OK")
</pallas_src>

<mosaic_0001>
module attributes {stable_mosaic.version = 11 : i64} {
  func.func @_encoder_decoder_kernel(%arg0: i32, %arg1: memref<8x20xf32, #tpu.memory_space<vmem>>, %arg2: memref<20x256xbf16, #tpu.memory_space<vmem>>, %arg3: memref<1x256xf32, #tpu.memory_space<vmem>>, %arg4: memref<256x256xbf16, #tpu.memory_space<vmem>>, %arg5: memref<1x256xf32, #tpu.memory_space<vmem>>, %arg6: memref<256x640xbf16, #tpu.memory_space<vmem>>, %arg7: memref<1x512xf32, #tpu.memory_space<vmem>>, %arg8: memref<512x128xbf16, #tpu.memory_space<vmem>>, %arg9: memref<1x128xf32, #tpu.memory_space<vmem>>, %arg10: memref<8x384xf32, #tpu.memory_space<vmem>>) attributes {dimension_semantics = [#tpu.dimension_semantics<parallel>], iteration_bounds = array<i64: 1>, scalar_prefetch = 0 : i64, scratch_operands = 0 : i64, tpu.core_type = #tpu.core_type<tc>, window_params = [{transform_indices = @transform_0, window_bounds = array<i64: 8, 20>}, {pipeline_mode = #tpu.pipeline_mode<synchronous>, transform_indices = @transform_1, window_bounds = array<i64: 20, 256>}, {pipeline_mode = #tpu.pipeline_mode<synchronous>, transform_indices = @transform_2, window_bounds = array<i64: 1, 256>}, {pipeline_mode = #tpu.pipeline_mode<synchronous>, transform_indices = @transform_3, window_bounds = array<i64: 256, 256>}, {pipeline_mode = #tpu.pipeline_mode<synchronous>, transform_indices = @transform_4, window_bounds = array<i64: 1, 256>}, {pipeline_mode = #tpu.pipeline_mode<synchronous>, transform_indices = @transform_5, window_bounds = array<i64: 256, 640>}, {pipeline_mode = #tpu.pipeline_mode<synchronous>, transform_indices = @transform_6, window_bounds = array<i64: 1, 512>}, {pipeline_mode = #tpu.pipeline_mode<synchronous>, transform_indices = @transform_7, window_bounds = array<i64: 512, 128>}, {pipeline_mode = #tpu.pipeline_mode<synchronous>, transform_indices = @transform_8, window_bounds = array<i64: 1, 128>}, {transform_indices = @transform_9, window_bounds = array<i64: 8, 384>}]} {
    %c0 = arith.constant 0 : index
    %c0_0 = arith.constant 0 : index
    %0 = vector.load %arg1[%c0, %c0_0] : memref<8x20xf32, #tpu.memory_space<vmem>>, vector<8x20xf32>
    %1 = arith.truncf %0 : vector<8x20xf32> to vector<8x20xbf16>
    %c0_1 = arith.constant 0 : index
    %c0_2 = arith.constant 0 : index
    %2 = vector.load %arg2[%c0_1, %c0_2] : memref<20x256xbf16, #tpu.memory_space<vmem>>, vector<20x256xbf16>
    %cst = arith.constant dense<0.000000e+00> : vector<8x256xf32>
    %3 = tpu.matmul %1, %2, %cst {dimension_numbers = #tpu.dot_dimension_numbers<[1], [0], [0], [1], [0, 0, 1, 1], [], []>} : vector<8x20xbf16>, vector<20x256xbf16>, vector<8x256xf32> -> vector<8x256xf32>
    %c0_3 = arith.constant 0 : index
    %c0_4 = arith.constant 0 : index
    %4 = vector.load %arg3[%c0_3, %c0_4] : memref<1x256xf32, #tpu.memory_space<vmem>>, vector<1x256xf32>
    %5 = vector.broadcast %4 : vector<1x256xf32> to vector<8x256xf32>
    %6 = arith.addf %3, %5 : vector<8x256xf32>
    %cst_5 = arith.constant 0.000000e+00 : f32
    %7 = vector.broadcast %cst_5 : f32 to vector<8x256xf32>
    %8 = arith.maximumf %6, %7 : vector<8x256xf32>
    %9 = arith.truncf %8 : vector<8x256xf32> to vector<8x256xbf16>
    %c0_6 = arith.constant 0 : index
    %c0_7 = arith.constant 0 : index
    %10 = vector.load %arg4[%c0_6, %c0_7] : memref<256x256xbf16, #tpu.memory_space<vmem>>, vector<256x256xbf16>
    %cst_8 = arith.constant dense<0.000000e+00> : vector<8x256xf32>
    %11 = tpu.matmul %9, %10, %cst_8 {dimension_numbers = #tpu.dot_dimension_numbers<[1], [0], [0], [1], [0, 0, 1, 1], [], []>} : vector<8x256xbf16>, vector<256x256xbf16>, vector<8x256xf32> -> vector<8x256xf32>
    %c0_9 = arith.constant 0 : index
    %c0_10 = arith.constant 0 : index
    %12 = vector.load %arg5[%c0_9, %c0_10] : memref<1x256xf32, #tpu.memory_space<vmem>>, vector<1x256xf32>
    %13 = vector.broadcast %12 : vector<1x256xf32> to vector<8x256xf32>
    %14 = arith.addf %11, %13 : vector<8x256xf32>
    %cst_11 = arith.constant 0.000000e+00 : f32
    %15 = vector.broadcast %cst_11 : f32 to vector<8x256xf32>
    %16 = arith.maximumf %14, %15 : vector<8x256xf32>
    %17 = arith.truncf %16 : vector<8x256xf32> to vector<8x256xbf16>
    %c0_12 = arith.constant 0 : index
    %c0_13 = arith.constant 0 : index
    %18 = vector.load %arg6[%c0_12, %c0_13] : memref<256x640xbf16, #tpu.memory_space<vmem>>, vector<256x640xbf16>
    %cst_14 = arith.constant dense<0.000000e+00> : vector<8x640xf32>
    %19 = tpu.matmul %17, %18, %cst_14 {dimension_numbers = #tpu.dot_dimension_numbers<[1], [0], [0], [1], [0, 0, 1, 1], [], []>} : vector<8x256xbf16>, vector<256x640xbf16>, vector<8x640xf32> -> vector<8x640xf32>
    %20 = vector.extract_strided_slice %19 {offsets = [0, 0], sizes = [8, 512], strides = [1, 1]} : vector<8x640xf32> to vector<8x512xf32>
    %c0_15 = arith.constant 0 : index
    %c0_16 = arith.constant 0 : index
    %21 = vector.load %arg7[%c0_15, %c0_16] : memref<1x512xf32, #tpu.memory_space<vmem>>, vector<1x512xf32>
    %22 = vector.broadcast %21 : vector<1x512xf32> to vector<8x512xf32>
    %23 = arith.addf %20, %22 : vector<8x512xf32>
    %cst_17 = arith.constant 0.000000e+00 : f32
    %24 = vector.broadcast %cst_17 : f32 to vector<8x512xf32>
    %25 = arith.maximumf %23, %24 : vector<8x512xf32>
    %26 = vector.extract_strided_slice %19 {offsets = [0, 512], sizes = [8, 128], strides = [1, 1]} : vector<8x640xf32> to vector<8x128xf32>
    %27 = arith.truncf %25 : vector<8x512xf32> to vector<8x512xbf16>
    %c0_18 = arith.constant 0 : index
    %c0_19 = arith.constant 0 : index
    %28 = vector.load %arg8[%c0_18, %c0_19] : memref<512x128xbf16, #tpu.memory_space<vmem>>, vector<512x128xbf16>
    %cst_20 = arith.constant dense<0.000000e+00> : vector<8x128xf32>
    %29 = tpu.matmul %27, %28, %cst_20 {dimension_numbers = #tpu.dot_dimension_numbers<[1], [0], [0], [1], [0, 0, 1, 1], [], []>} : vector<8x512xbf16>, vector<512x128xbf16>, vector<8x128xf32> -> vector<8x128xf32>
    %30 = arith.addf %29, %26 : vector<8x128xf32>
    %c0_21 = arith.constant 0 : index
    %c0_22 = arith.constant 0 : index
    %31 = vector.load %arg9[%c0_21, %c0_22] : memref<1x128xf32, #tpu.memory_space<vmem>>, vector<1x128xf32>
    %32 = vector.broadcast %31 : vector<1x128xf32> to vector<8x128xf32>
    %33 = arith.addf %30, %32 : vector<8x128xf32>
    %c0_23 = arith.constant 0 : index
    %c0_24 = arith.constant 0 : index
    %34 = vector.load %arg10[%c0_23, %c0_24] : memref<8x384xf32, #tpu.memory_space<vmem>>, vector<8x256xf32>
    tpu.vector_store %arg10[%c0_23, %c0_24], %16 {strides = array<i32>} : memref<8x384xf32, #tpu.memory_space<vmem>>, vector<8x256xf32>,
    %c0_25 = arith.constant 0 : index
    %c256 = arith.constant 256 : index
    %35 = vector.load %arg10[%c0_25, %c256] : memref<8x384xf32, #tpu.memory_space<vmem>>, vector<8x128xf32>
    tpu.vector_store %arg10[%c0_25, %c256], %33 {strides = array<i32>} : memref<8x384xf32, #tpu.memory_space<vmem>>, vector<8x128xf32>,
    return
  }
  func.func @transform_0(%arg0: i32) -> (i32, i32) {
    %c0_i32 = arith.constant 0 : i32
    %c0_i32_0 = arith.constant 0 : i32
    return %arg0, %c0_i32 : i32, i32
  }
  func.func @transform_1(%arg0: i32) -> (i32, i32) {
    %c0_i32 = arith.constant 0 : i32
    %c0_i32_0 = arith.constant 0 : i32
    %c0_i32_1 = arith.constant 0 : i32
    return %c0_i32, %c0_i32_0 : i32, i32
  }
  func.func @transform_2(%arg0: i32) -> (i32, i32) {
    %c0_i32 = arith.constant 0 : i32
    %c0_i32_0 = arith.constant 0 : i32
    %c0_i32_1 = arith.constant 0 : i32
    return %c0_i32, %c0_i32_0 : i32, i32
  }
  func.func @transform_3(%arg0: i32) -> (i32, i32) {
    %c0_i32 = arith.constant 0 : i32
    %c0_i32_0 = arith.constant 0 : i32
    %c0_i32_1 = arith.constant 0 : i32
    return %c0_i32, %c0_i32_0 : i32, i32
  }
  func.func @transform_4(%arg0: i32) -> (i32, i32) {
    %c0_i32 = arith.constant 0 : i32
    %c0_i32_0 = arith.constant 0 : i32
    %c0_i32_1 = arith.constant 0 : i32
    return %c0_i32, %c0_i32_0 : i32, i32
  }
  func.func @transform_5(%arg0: i32) -> (i32, i32) {
    %c0_i32 = arith.constant 0 : i32
    %c0_i32_0 = arith.constant 0 : i32
    %c0_i32_1 = arith.constant 0 : i32
    return %c0_i32, %c0_i32_0 : i32, i32
  }
  func.func @transform_6(%arg0: i32) -> (i32, i32) {
    %c0_i32 = arith.constant 0 : i32
    %c0_i32_0 = arith.constant 0 : i32
    %c0_i32_1 = arith.constant 0 : i32
    return %c0_i32, %c0_i32_0 : i32, i32
  }
  func.func @transform_7(%arg0: i32) -> (i32, i32) {
    %c0_i32 = arith.constant 0 : i32
    %c0_i32_0 = arith.constant 0 : i32
    %c0_i32_1 = arith.constant 0 : i32
    return %c0_i32, %c0_i32_0 : i32, i32
  }
  func.func @transform_8(%arg0: i32) -> (i32, i32) {
    %c0_i32 = arith.constant 0 : i32
    %c0_i32_0 = arith.constant 0 : i32
    %c0_i32_1 = arith.constant 0 : i32
    return %c0_i32, %c0_i32_0 : i32, i32
  }
  func.func @transform_9(%arg0: i32) -> (i32, i32) {
    %c0_i32 = arith.constant 0 : i32
    %c0_i32_0 = arith.constant 0 : i32
    return %arg0, %c0_i32 : i32, i32
  }
}

</mosaic_0001>

<llo_original>
// kernel: tpu_custom_call.1
$region0: #{tpu_custom_call.1}
  #allocation0 [shape = 'u32[]', space=smem, size = 0x4, offset = 0x4, fixed_abs, tag = 'smem constant byte address 0x4 - core index']
  #allocation1 [shape = 'u32[72,128]{1,0:T(1,128)}', space=vmem, size = 0x9000, scoped, tag = 'internal scratch']
  %s0 = inlined_call_operand.hbm [shape: f32[8,20], index: 0, kind: input, shape index: {}]
  %s1 = inlined_call_operand.hbm [shape: bf16[20,256], index: 1, kind: input, shape index: {}]
  %s2 = inlined_call_operand.hbm [shape: f32[1,256], index: 2, kind: input, shape index: {}]
  %s3 = inlined_call_operand.hbm [shape: bf16[256,256], index: 3, kind: input, shape index: {}]
  %s4 = inlined_call_operand.hbm [shape: f32[1,256], index: 4, kind: input, shape index: {}]
  %s5 = inlined_call_operand.hbm [shape: bf16[256,640], index: 5, kind: input, shape index: {}]
  %s6 = inlined_call_operand.vmem [shape: f32[1,512], index: 6, kind: input, shape index: {}]
  %s7 = inlined_call_operand.hbm [shape: bf16[512,128], index: 7, kind: input, shape index: {}]
  %s8 = inlined_call_operand.vmem [shape: f32[1,128], index: 8, kind: input, shape index: {}]
  %s9 = inlined_call_operand.hbm [shape: f32[8,384], index: 9, kind: output, shape index: {}]
  %s10 = sld [smem:[#allocation0]]
  $region74: #{tpu_custom_call.1} parent=0
    _
  %s12 = ssub.s32 1, %s10
  %s13 = scalar_select 0, %s12, %s10
  $region1: #{tpu_custom_call.1} parent=0
    #allocation2 [shape = 'u8[4096]{0}', space=vmem, size = 0x1000, scoped, tag = 'input window, operand 0, single buffered']
    #allocation3 [shape = 's32[1]{0}', space=sflag, size = 0x4, scoped, tag = 'scoped memory for tpu_custom_call.1']
    #allocation4 [shape = 's32[1]{0}', space=sflag, size = 0x4, scoped, tag = 'scoped memory for tpu_custom_call.1']
    #allocation5 [shape = 'u8[12288]{0}', space=vmem, size = 0x3000, scoped, tag = 'input window, operand 1, single buffered']
    #allocation6 [shape = 's32[1]{0}', space=sflag, size = 0x4, scoped, tag = 'scoped memory for tpu_custom_call.1']
    #allocation7 [shape = 'u8[1024]{0}', space=vmem, size = 0x400, scoped, tag = 'input window, operand 2, single buffered']
    #allocation8 [shape = 'u8[131072]{0}', space=vmem, size = 0x20000, scoped, tag = 'input window, operand 3, single buffered']
    #allocation9 [shape = 's32[1]{0}', space=sflag, size = 0x4, scoped, tag = 'scoped memory for tpu_custom_call.1']
    #allocation10 [shape = 'u8[1024]{0}', space=vmem, size = 0x400, scoped, tag = 'input window, operand 4, single buffered']
    #allocation11 [shape = 'u8[327680]{0}', space=vmem, size = 0x50000, scoped, tag = 'input window, operand 5, single buffered']
    #allocation12 [shape = 's32[1]{0}', space=sflag, size = 0x4, scoped, tag = 'scoped memory for tpu_custom_call.1']
    #allocation13 [shape = 'u8[131072]{0}', space=vmem, size = 0x20000, scoped, tag = 'input window, operand 7, single buffered']
    #allocation14 [shape = 'u8[12288]{0}', space=vmem, size = 0x3000, scoped, tag = 'output window, operand 0, single buffered']
    %14 = vsyncpa [#allocation3], 0
    %15 = vsyncpa [#allocation6], 0
    %16 = vsyncpa [#allocation9], 0
    %17 = vsyncpa [#allocation12], 0
    %18 = vsyncpa [#allocation4], 0
    // Predicated region
    $region2: #{tpu_custom_call.1} parent=1 // pred_check
      _
    $region3: #{tpu_custom_call.1} parent=1 // pred_check_branch
      %20 = sbr.rel (0) target = $region5
    $region4: #{tpu_custom_call.1} parent=1 // pred_region
      %22 = vsyncadd [#allocation3], 0
      %s24 = sshll.u32 %s0, 4
      %s25 = int_to_ptr.hbm [resolvable:$true] %s24
      %s26 = sshll.u32 [#allocation2], 4
      %s27 = int_to_ptr.vmem [resolvable:$true] %s26
      %29 = dma.hbm_to_vmem [thread:$0]  %s25, 128, %s27, [#allocation3]
    $region5: #{tpu_custom_call.1} parent=1 // pred_fallthru
      _
    // Predicated region
    $region6: #{tpu_custom_call.1} parent=1 // pred_check
      _
    $region7: #{tpu_custom_call.1} parent=1 // pred_check_branch
      %31 = sbr.rel (0) target = $region9
    $region8: #{tpu_custom_call.1} parent=1 // pred_region
      %33 = vsyncadd [#allocation6], 0
      %s34 = sshll.u32 %s1, 4
      %s35 = int_to_ptr.hbm [resolvable:$true] %s34
      %s36 = sshll.u32 [#allocation5], 4
      %s37 = int_to_ptr.vmem [resolvable:$true] %s36
      %42 = dma.hbm_to_vmem [thread:$0]  %s35, 384, %s37, [#allocation6], 128, 128, 8
    $region9: #{tpu_custom_call.1} parent=1 // pred_fallthru
      _
    // Predicated region
    $region10: #{tpu_custom_call.1} parent=1 // pred_check
      _
    $region11: #{tpu_custom_call.1} parent=1 // pred_check_branch
      %44 = sbr.rel (0) target = $region13
    $region12: #{tpu_custom_call.1} parent=1 // pred_region
      %46 = vsyncadd [#allocation6], 0
      %s48 = sshll.u32 %s2, 4
      %s49 = int_to_ptr.hbm [resolvable:$true] %s48
      %s50 = sshll.u32 [#allocation7], 4
      %s51 = int_to_ptr.vmem [resolvable:$true] %s50
      %53 = dma.hbm_to_vmem [thread:$0]  %s49, 32, %s51, [#allocation6]
    $region13: #{tpu_custom_call.1} parent=1 // pred_fallthru
      _
    // Predicated region
    $region14: #{tpu_custom_call.1} parent=1 // pred_check
      _
    $region15: #{tpu_custom_call.1} parent=1 // pred_check_branch
      %55 = sbr.rel (0) target = $region17
    $region16: #{tpu_custom_call.1} parent=1 // pred_region
      %57 = vsyncadd [#allocation9], 0
      %s58 = sshll.u32 %s3, 4
      %s59 = int_to_ptr.hbm [resolvable:$true] %s58
      %s60 = sshll.u32 [#allocation8], 4
      %s61 = int_to_ptr.vmem [resolvable:$true] %s60
      %66 = dma.hbm_to_vmem [thread:$0]  %s59, 4096, %s61, [#allocation9], 128, 128, 8
    $region17: #{tpu_custom_call.1} parent=1 // pred_fallthru
      _
    // Predicated region
    $region18: #{tpu_custom_call.1} parent=1 // pred_check
      _
    $region19: #{tpu_custom_call.1} parent=1 // pred_check_branch
      %68 = sbr.rel (0) target = $region21
    $region20: #{tpu_custom_call.1} parent=1 // pred_region
      %70 = vsyncadd [#allocation9], 0
      %s72 = sshll.u32 %s4, 4
      %s73 = int_to_ptr.hbm [resolvable:$true] %s72
      %s74 = sshll.u32 [#allocation10], 4
      %s75 = int_to_ptr.vmem [resolvable:$true] %s74
      %77 = dma.hbm_to_vmem [thread:$0]  %s73, 32, %s75, [#allocation9]
    $region21: #{tpu_custom_call.1} parent=1 // pred_fallthru
      _
    // Predicated region
    $region22: #{tpu_custom_call.1} parent=1 // pred_check
      _
    $region23: #{tpu_custom_call.1} parent=1 // pred_check_branch
      %79 = sbr.rel (0) target = $region25
    $region24: #{tpu_custom_call.1} parent=1 // pred_region
      %81 = vsyncadd [#allocation12], 0
      %s82 = sshll.u32 %s5, 4
      %s83 = int_to_ptr.hbm [resolvable:$true] %s82
      %s84 = sshll.u32 [#allocation11], 4
      %s85 = int_to_ptr.vmem [resolvable:$true] %s84
      %90 = dma.hbm_to_vmem [thread:$0]  %s83, 10240, %s85, [#allocation12], 320, 320, 20
    $region25: #{tpu_custom_call.1} parent=1 // pred_fallthru
      _
    // Predicated region
    $region26: #{tpu_custom_call.1} parent=1 // pred_check
      _
    $region27: #{tpu_custom_call.1} parent=1 // pred_check_branch
      %92 = sbr.rel (0) target = $region29
    $region28: #{tpu_custom_call.1} parent=1 // pred_region
      _
    $region29: #{tpu_custom_call.1} parent=1 // pred_fallthru
      _
    // Predicated region
    $region30: #{tpu_custom_call.1} parent=1 // pred_check
      _
    $region31: #{tpu_custom_call.1} parent=1 // pred_check_branch
      %94 = sbr.rel (0) target = $region33
    $region32: #{tpu_custom_call.1} parent=1 // pred_region
      %96 = vsyncadd [#allocation12], 0
      %s97 = sshll.u32 %s7, 4
      %s98 = int_to_ptr.hbm [resolvable:$true] %s97
      %s99 = sshll.u32 [#allocation13], 4
      %s100 = int_to_ptr.vmem [resolvable:$true] %s99
      %105 = dma.hbm_to_vmem [thread:$0]  %s98, 4096, %s100, [#allocation12], 64, 64, 4
    $region33: #{tpu_custom_call.1} parent=1 // pred_fallthru
      _
    // Predicated region
    $region34: #{tpu_custom_call.1} parent=1 // pred_check
      _
    $region35: #{tpu_custom_call.1} parent=1 // pred_check_branch
      %107 = sbr.rel (0) target = $region37
    $region36: #{tpu_custom_call.1} parent=1 // pred_region
      _
    $region37: #{tpu_custom_call.1} parent=1 // pred_fallthru
      _
    // Predicated region
    $region38: #{tpu_custom_call.1} parent=1 // pred_check
      _
    $region39: #{tpu_custom_call.1} parent=1 // pred_check_branch
      %109 = sbr.rel (0) target = $region41
    $region40: #{tpu_custom_call.1} parent=1 // pred_region
      %111 = dma.done [#allocation3], 128
    $region41: #{tpu_custom_call.1} parent=1 // pred_fallthru
      _
    // Predicated region
    $region42: #{tpu_custom_call.1} parent=1 // pred_check
      _
    $region43: #{tpu_custom_call.1} parent=1 // pred_check_branch
      %113 = sbr.rel (0) target = $region45
    $region44: #{tpu_custom_call.1} parent=1 // pred_region
      %115 = dma.done [#allocation6], 384
    $region45: #{tpu_custom_call.1} parent=1 // pred_fallthru
      _
    // Predicated region
    $region46: #{tpu_custom_call.1} parent=1 // pred_check
      _
    $region47: #{tpu_custom_call.1} parent=1 // pred_check_branch
      %117 = sbr.rel (0) target = $region49
    $region48: #{tpu_custom_call.1} parent=1 // pred_region
      %119 = dma.done [#allocation6], 32
    $region49: #{tpu_custom_call.1} parent=1 // pred_fallthru
      _
    // Predicated region
    $region50: #{tpu_custom_call.1} parent=1 // pred_check
      _
    $region51: #{tpu_custom_call.1} parent=1 // pred_check_branch
      %121 = sbr.rel (0) target = $region53
    $region52: #{tpu_custom_call.1} parent=1 // pred_region
      %123 = dma.done [#allocation9], 4096
    $region53: #{tpu_custom_call.1} parent=1 // pred_fallthru
      _
    // Predicated region
    $region54: #{tpu_custom_call.1} parent=1 // pred_check
      _
    $region55: #{tpu_custom_call.1} parent=1 // pred_check_branch
      %125 = sbr.rel (0) target = $region57
    $region56: #{tpu_custom_call.1} parent=1 // pred_region
      %127 = dma.done [#allocation9], 32
    $region57: #{tpu_custom_call.1} parent=1 // pred_fallthru
      _
    // Predicated region
    $region58: #{tpu_custom_call.1} parent=1 // pred_check
      _
    $region59: #{tpu_custom_call.1} parent=1 // pred_check_branch
      %129 = sbr.rel (0) target = $region61
    $region60: #{tpu_custom_call.1} parent=1 // pred_region
      %131 = dma.done [#allocation12], 10240
    $region61: #{tpu_custom_call.1} parent=1 // pred_fallthru
      _
    // Predicated region
    $region62: #{tpu_custom_call.1} parent=1 // pred_check
      _
    $region63: #{tpu_custom_call.1} parent=1 // pred_check_branch
      %133 = sbr.rel (0) target = $region65
    $region64: #{tpu_custom_call.1} parent=1 // pred_region
      %135 = dma.done [#allocation12], 4096
    $region65: #{tpu_custom_call.1} parent=1 // pred_fallthru
      _
    %v137 = vld [vmem:[#allocation2] sm:$0xff]
    %v138 = vpack.c.bf16 %v137, %v137
    %v139 = vld [vmem:[#allocation5] sm:$0xff]
    %v140 = vld [vmem:[#allocation5 + $0x8] sm:$0xff]
    %v141 = vld [vmem:[#allocation5 + $0x10] sm:$0x33]
    %v142 = vld [vmem:[#allocation7] sm:$0x3]
    %v144 = vperm.slane %v142, 0
    %v145 = vperm.slane %v142, 1
    %v151 = vunpack.c.l.b16 %v139
    %v152 = vunpack.c.h.b16 %v139
    %v153 = vunpack.c.l.b16 %v140
    %v154 = vunpack.c.h.b16 %v140
    %v155 = vunpack.c.l.b16 %v141
    %v156 = vunpack.c.h.b16 %v141
    %v157 = vpack.c.b16 %v153, %v151
    %v158 = vpack.c.b16 %v154, %v152
    %v159 = vpack.c.b16 %v155, %v155
    %v160 = vpack.c.b16 %v156, %v156
    %vm163 = vcmask 162816
    %v165 = vsel %vm163, %v138, 0
    %vm167 = vcmask 1041408
    %v169 = vsel %vm167, %v159, 0
    %v172 = vsel %vm167, %v160, 0
    %174 = vmatpush.bf16.msra.mxu0 0
    %175 = vmatpush.bf16.msra.mxu0 0
    %176 = vmatpush.bf16.msra.mxu0 0
    %177 = vmatpush.bf16.msra.mxu0 0
    %178 = vmatpush.bf16.msra.mxu0 0
    %179 = vmatpush.bf16.msra.mxu0 0
    %180 = vmatpush.bf16.msra.mxu0 %v169
    %181 = vmatpush.bf16.msra.mxu0 %v157
    %182 = vmatmul.bf16.gmra.mxu0 %v165
    %v183 = vpop.f32.mrf.mxu0
    %v184 = vadd.f32 %v144, %v183
    %v185 = vpop.f32.mrf.mxu0
    %186 = vdwg.mxu0
    %187 = vmatpush.bf16.msra.mxu0 0
    %188 = vmatpush.bf16.msra.mxu0 0
    %189 = vmatpush.bf16.msra.mxu0 0
    %190 = vmatpush.bf16.msra.mxu0 0
    %191 = vmatpush.bf16.msra.mxu0 0
    %192 = vmatpush.bf16.msra.mxu0 0
    %193 = vmatpush.bf16.msra.mxu0 %v172
    %194 = vmatpush.bf16.msra.mxu0 %v158
    %195 = vmatmul.bf16.gmra.mxu0 %v165
    %v196 = vpop.f32.mrf.mxu0
    %v197 = vadd.f32 %v145, %v196
    %v198 = vpop.f32.mrf.mxu0
    %199 = vdwg.mxu0
    %v200 = vmax.f32 %v184, 0.0
    %v201 = vmax.f32 %v197, 0.0
    %v202 = vpack.c.bf16 %v200, %v200
    %v203 = vpack.c.bf16 %v201, %v201
    %v204 = vld [vmem:[#allocation8] sm:$0xff]
    %v205 = vld [vmem:[#allocation8 + $0x8] sm:$0xff]
    %v206 = vld [vmem:[#allocation8 + $0x10] sm:$0xff]
    %v207 = vld [vmem:[#allocation8 + $0x18] sm:$0xff]
    %v208 = vld [vmem:[#allocation8 + $0x20] sm:$0xff]
    %v209 = vld [vmem:[#allocation8 + $0x28] sm:$0xff]
    %v210 = vld [vmem:[#allocation8 + $0x30] sm:$0xff]
    %v211 = vld [vmem:[#allocation8 + $0x38] sm:$0xff]
    %v212 = vld [vmem:[#allocation8 + $0x40] sm:$0xff]
    %v213 = vld [vmem:[#allocation8 + $0x48] sm:$0xff]
    %v214 = vld [vmem:[#allocation8 + $0x50] sm:$0xff]
    %v215 = vld [vmem:[#allocation8 + $0x58] sm:$0xff]
    %v216 = vld [vmem:[#allocation8 + $0x60] sm:$0xff]
    %v217 = vld [vmem:[#allocation8 + $0x68] sm:$0xff]
    %v218 = vld [vmem:[#allocation8 + $0x70] sm:$0xff]
    %v219 = vld [vmem:[#allocation8 + $0x78] sm:$0xff]
    %v220 = vld [vmem:[#allocation8 + $0x80] sm:$0xff]
    %v221 = vld [vmem:[#allocation8 + $0x88] sm:$0xff]
    %v222 = vld [vmem:[#allocation8 + $0x90] sm:$0xff]
    %v223 = vld [vmem:[#allocation8 + $0x98] sm:$0xff]
    %v224 = vld [vmem:[#allocation8 + $0xa0] sm:$0xff]
    %v225 = vld [vmem:[#allocation8 + $0xa8] sm:$0xff]
    %v226 = vld [vmem:[#allocation8 + $0xb0] sm:$0xff]
    %v227 = vld [vmem:[#allocation8 + $0xb8] sm:$0xff]
    %v228 = vld [vmem:[#allocation8 + $0xc0] sm:$0xff]
    %v229 = vld [vmem:[#allocation8 + $0xc8] sm:$0xff]
    %v230 = vld [vmem:[#allocation8 + $0xd0] sm:$0xff]
    %v231 = vld [vmem:[#allocation8 + $0xd8] sm:$0xff]
    %v232 = vld [vmem:[#allocation8 + $0xe0] sm:$0xff]
    %v233 = vld [vmem:[#allocation8 + $0xe8] sm:$0xff]
    %v234 = vld [vmem:[#allocation8 + $0xf0] sm:$0xff]
    %v235 = vld [vmem:[#allocation8 + $0xf8] sm:$0xff]
    %v236 = vld [vmem:[#allocation10] sm:$0x3]
    %v238 = vperm.slane %v236, 0
    %v239 = vperm.slane %v236, 1
    %v274 = vunpack.c.l.b16 %v204
    %v275 = vunpack.c.h.b16 %v204
    %v276 = vunpack.c.l.b16 %v205
    %v277 = vunpack.c.h.b16 %v205
    %v278 = vunpack.c.l.b16 %v206
    %v279 = vunpack.c.h.b16 %v206
    %v280 = vunpack.c.l.b16 %v207
    %v281 = vunpack.c.h.b16 %v207
    %v282 = vunpack.c.l.b16 %v208
    %v283 = vunpack.c.h.b16 %v208
    %v284 = vunpack.c.l.b16 %v209
    %v285 = vunpack.c.h.b16 %v209
    %v286 = vunpack.c.l.b16 %v210
    %v287 = vunpack.c.h.b16 %v210
    %v288 = vunpack.c.l.b16 %v211
    %v289 = vunpack.c.h.b16 %v211
    %v290 = vunpack.c.l.b16 %v212
    %v291 = vunpack.c.h.b16 %v212
    %v292 = vunpack.c.l.b16 %v213
    %v293 = vunpack.c.h.b16 %v213
    %v294 = vunpack.c.l.b16 %v214
    %v295 = vunpack.c.h.b16 %v214
    %v296 = vunpack.c.l.b16 %v215
    %v297 = vunpack.c.h.b16 %v215
    %v298 = vunpack.c.l.b16 %v216
    %v299 = vunpack.c.h.b16 %v216
    %v300 = vunpack.c.l.b16 %v217
    %v301 = vunpack.c.h.b16 %v217
    %v302 = vunpack.c.l.b16 %v218
    %v303 = vunpack.c.h.b16 %v218
    %v304 = vunpack.c.l.b16 %v219
    %v305 = vunpack.c.h.b16 %v219
    %v306 = vunpack.c.l.b16 %v220
    %v307 = vunpack.c.h.b16 %v220
    %v308 = vunpack.c.l.b16 %v221
    %v309 = vunpack.c.h.b16 %v221
    %v310 = vunpack.c.l.b16 %v222
    %v311 = vunpack.c.h.b16 %v222
    %v312 = vunpack.c.l.b16 %v223
    %v313 = vunpack.c.h.b16 %v223
    %v314 = vunpack.c.l.b16 %v224
    %v315 = vunpack.c.h.b16 %v224
    %v316 = vunpack.c.l.b16 %v225
    %v317 = vunpack.c.h.b16 %v225
    %v318 = vunpack.c.l.b16 %v226
    %v319 = vunpack.c.h.b16 %v226
    %v320 = vunpack.c.l.b16 %v227
    %v321 = vunpack.c.h.b16 %v227
    %v322 = vunpack.c.l.b16 %v228
    %v323 = vunpack.c.h.b16 %v228
    %v324 = vunpack.c.l.b16 %v229
    %v325 = vunpack.c.h.b16 %v229
    %v326 = vunpack.c.l.b16 %v230
    %v327 = vunpack.c.h.b16 %v230
    %v328 = vunpack.c.l.b16 %v231
    %v329 = vunpack.c.h.b16 %v231
    %v330 = vunpack.c.l.b16 %v232
    %v331 = vunpack.c.h.b16 %v232
    %v332 = vunpack.c.l.b16 %v233
    %v333 = vunpack.c.h.b16 %v233
    %v334 = vunpack.c.l.b16 %v234
    %v335 = vunpack.c.h.b16 %v234
    %v336 = vunpack.c.l.b16 %v235
    %v337 = vunpack.c.h.b16 %v235
    %v338 = vpack.c.b16 %v276, %v274
    %v339 = vpack.c.b16 %v277, %v275
    %v340 = vpack.c.b16 %v280, %v278
    %v341 = vpack.c.b16 %v281, %v279
    %v342 = vpack.c.b16 %v284, %v282
    %v343 = vpack.c.b16 %v285, %v283
    %v344 = vpack.c.b16 %v288, %v286
    %v345 = vpack.c.b16 %v289, %v287
    %v346 = vpack.c.b16 %v292, %v290
    %v347 = vpack.c.b16 %v293, %v291
    %v348 = vpack.c.b16 %v296, %v294
    %v349 = vpack.c.b16 %v297, %v295
    %v350 = vpack.c.b16 %v300, %v298
    %v351 = vpack.c.b16 %v301, %v299
    %v352 = vpack.c.b16 %v304, %v302
    %v353 = vpack.c.b16 %v305, %v303
    %v354 = vpack.c.b16 %v308, %v306
    %v355 = vpack.c.b16 %v309, %v307
    %v356 = vpack.c.b16 %v312, %v310
    %v357 = vpack.c.b16 %v313, %v311
    %v358 = vpack.c.b16 %v316, %v314
    %v359 = vpack.c.b16 %v317, %v315
    %v360 = vpack.c.b16 %v320, %v318
    %v361 = vpack.c.b16 %v321, %v319
    %v362 = vpack.c.b16 %v324, %v322
    %v363 = vpack.c.b16 %v325, %v323
    %v364 = vpack.c.b16 %v328, %v326
    %v365 = vpack.c.b16 %v329, %v327
    %v366 = vpack.c.b16 %v332, %v330
    %v367 = vpack.c.b16 %v333, %v331
    %v368 = vpack.c.b16 %v336, %v334
    %v369 = vpack.c.b16 %v337, %v335
    %402 = vmatpush.bf16.msra.mxu0 %v352
    %403 = vmatpush.bf16.msra.mxu0 %v350
    %404 = vmatpush.bf16.msra.mxu0 %v348
    %405 = vmatpush.bf16.msra.mxu0 %v346
    %406 = vmatpush.bf16.msra.mxu0 %v344
    %407 = vmatpush.bf16.msra.mxu0 %v342
    %408 = vmatpush.bf16.msra.mxu0 %v340
    %409 = vmatpush.bf16.msra.mxu0 %v338
    %410 = vmatmul.bf16.gmra.mxu0 %v202
    %v411 = vpop.f32.mrf.mxu0
    %v412 = vadd.f32 %v238, %v411
    %v413 = vpop.f32.mrf.mxu0
    %414 = vdwg.mxu0
    %415 = vmatpush.bf16.msra.mxu0 %v368
    %416 = vmatpush.bf16.msra.mxu0 %v366
    %417 = vmatpush.bf16.msra.mxu0 %v364
    %418 = vmatpush.bf16.msra.mxu0 %v362
    %419 = vmatpush.bf16.msra.mxu0 %v360
    %420 = vmatpush.bf16.msra.mxu0 %v358
    %421 = vmatpush.bf16.msra.mxu0 %v356
    %422 = vmatpush.bf16.msra.mxu0 %v354
    %423 = vmatmul.bf16.gmra.mxu0 %v203
    %v424 = vpop.f32.mrf.mxu0
    %v425 = vadd.f32 %v412, %v424
    %v426 = vpop.f32.mrf.mxu0
    %427 = vdwg.mxu0
    %428 = vmatpush.bf16.msra.mxu0 %v353
    %429 = vmatpush.bf16.msra.mxu0 %v351
    %430 = vmatpush.bf16.msra.mxu0 %v349
    %431 = vmatpush.bf16.msra.mxu0 %v347
    %432 = vmatpush.bf16.msra.mxu0 %v345
    %433 = vmatpush.bf16.msra.mxu0 %v343
    %434 = vmatpush.bf16.msra.mxu0 %v341
    %435 = vmatpush.bf16.msra.mxu0 %v339
    %436 = vmatmul.bf16.gmra.mxu0 %v202
    %v437 = vpop.f32.mrf.mxu0
    %v438 = vadd.f32 %v239, %v437
    %v439 = vpop.f32.mrf.mxu0
    %440 = vdwg.mxu0
    %441 = vmatpush.bf16.msra.mxu0 %v369
    %442 = vmatpush.bf16.msra.mxu0 %v367
    %443 = vmatpush.bf16.msra.mxu0 %v365
    %444 = vmatpush.bf16.msra.mxu0 %v363
    %445 = vmatpush.bf16.msra.mxu0 %v361
    %446 = vmatpush.bf16.msra.mxu0 %v359
    %447 = vmatpush.bf16.msra.mxu0 %v357
    %448 = vmatpush.bf16.msra.mxu0 %v355
    %449 = vmatmul.bf16.gmra.mxu0 %v203
    %v450 = vpop.f32.mrf.mxu0
    %v451 = vadd.f32 %v438, %v450
    %v452 = vpop.f32.mrf.mxu0
    %453 = vdwg.mxu0
    %v454 = vmax.f32 %v425, 0.0
    %v455 = vmax.f32 %v451, 0.0
    %v456 = vpack.c.bf16 %v454, %v454
    %v457 = vpack.c.bf16 %v455, %v455
    %v458 = vld [vmem:[#allocation11] sm:$0xff]
    %v459 = vld [vmem:[#allocation11 + $0x8] sm:$0xff]
    %v460 = vld [vmem:[#allocation11 + $0x10] sm:$0xf]
    %v461 = vld [vmem:[#allocation11 + $0x14] sm:$0xff]
    %v462 = vld [vmem:[#allocation11 + $0x1c] sm:$0xff]
    %v463 = vld [vmem:[#allocation11 + $0x24] sm:$0xf]
    %v464 = vld [vmem:[#allocation11 + $0x28] sm:$0xff]
    %v465 = vld [vmem:[#allocation11 + $0x30] sm:$0xff]
    %v466 = vld [vmem:[#allocation11 + $0x38] sm:$0xf]
    %v467 = vld [vmem:[#allocation11 + $0x3c] sm:$0xff]
    %v468 = vld [vmem:[#allocation11 + $0x44] sm:$0xff]
    %v469 = vld [vmem:[#allocation11 + $0x4c] sm:$0xf]
    %v470 = vld [vmem:[#allocation11 + $0x50] sm:$0xff]
    %v471 = vld [vmem:[#allocation11 + $0x58] sm:$0xff]
    %v472 = vld [vmem:[#allocation11 + $0x60] sm:$0xf]
    %v473 = vld [vmem:[#allocation11 + $0x64] sm:$0xff]
    %v474 = vld [vmem:[#allocation11 + $0x6c] sm:$0xff]
    %v475 = vld [vmem:[#allocation11 + $0x74] sm:$0xf]
    %v476 = vld [vmem:[#allocation11 + $0x78] sm:$0xff]
    %v477 = vld [vmem:[#allocation11 + $0x80] sm:$0xff]
    %v478 = vld [vmem:[#allocation11 + $0x88] sm:$0xf]
    %v479 = vld [vmem:[#allocation11 + $0x8c] sm:$0xff]
    %v480 = vld [vmem:[#allocation11 + $0x94] sm:$0xff]
    %v481 = vld [vmem:[#allocation11 + $0x9c] sm:$0xf]
    %v482 = vld [vmem:[#allocation11 + $0xa0] sm:$0xff]
    %v483 = vld [vmem:[#allocation11 + $0xa8] sm:$0xff]
    %v484 = vld [vmem:[#allocation11 + $0xb0] sm:$0xf]
    %v485 = vld [vmem:[#allocation11 + $0xb4] sm:$0xff]
    %v486 = vld [vmem:[#allocation11 + $0xbc] sm:$0xff]
    %v487 = vld [vmem:[#allocation11 + $0xc4] sm:$0xf]
    %v488 = vld [vmem:[#allocation11 + $0xc8] sm:$0xff]
    %v489 = vld [vmem:[#allocation11 + $0xd0] sm:$0xff]
    %v490 = vld [vmem:[#allocation11 + $0xd8] sm:$0xf]
    %v491 = vld [vmem:[#allocation11 + $0xdc] sm:$0xff]
    %v492 = vld [vmem:[#allocation11 + $0xe4] sm:$0xff]
    %v493 = vld [vmem:[#allocation11 + $0xec] sm:$0xf]
    %v494 = vld [vmem:[#allocation11 + $0xf0] sm:$0xff]
    %v495 = vld [vmem:[#allocation11 + $0xf8] sm:$0xff]
    %v496 = vld [vmem:[#allocation11 + $0x100] sm:$0xf]
    %v497 = vld [vmem:[#allocation11 + $0x104] sm:$0xff]
    %v498 = vld [vmem:[#allocation11 + $0x10c] sm:$0xff]
    %v499 = vld [vmem:[#allocation11 + $0x114] sm:$0xf]
    %v500 = vld [vmem:[#allocation11 + $0x118] sm:$0xff]
    %v501 = vld [vmem:[#allocation11 + $0x120] sm:$0xff]
    %v502 = vld [vmem:[#allocation11 + $0x128] sm:$0xf]
    %v503 = vld [vmem:[#allocation11 + $0x12c] sm:$0xff]
    %v504 = vld [vmem:[#allocation11 + $0x134] sm:$0xff]
    %v505 = vld [vmem:[#allocation11 + $0x13c] sm:$0xf]
    %v506 = vld [vmem:[#allocation11 + $0x140] sm:$0xff]
    %v507 = vld [vmem:[#allocation11 + $0x148] sm:$0xff]
    %v508 = vld [vmem:[#allocation11 + $0x150] sm:$0xf]
    %v509 = vld [vmem:[#allocation11 + $0x154] sm:$0xff]
    %v510 = vld [vmem:[#allocation11 + $0x15c] sm:$0xff]
    %v511 = vld [vmem:[#allocation11 + $0x164] sm:$0xf]
    %v512 = vld [vmem:[#allocation11 + $0x168] sm:$0xff]
    %v513 = vld [vmem:[#allocation11 + $0x170] sm:$0xff]
    %v514 = vld [vmem:[#allocation11 + $0x178] sm:$0xf]
    %v515 = vld [vmem:[#allocation11 + $0x17c] sm:$0xff]
    %v516 = vld [vmem:[#allocation11 + $0x184] sm:$0xff]
    %v517 = vld [vmem:[#allocation11 + $0x18c] sm:$0xf]
    %v518 = vld [vmem:[#allocation11 + $0x190] sm:$0xff]
    %v519 = vld [vmem:[#allocation11 + $0x198] sm:$0xff]
    %v520 = vld [vmem:[#allocation11 + $0x1a0] sm:$0xf]
    %v521 = vld [vmem:[#allocation11 + $0x1a4] sm:$0xff]
    %v522 = vld [vmem:[#allocation11 + $0x1ac] sm:$0xff]
    %v523 = vld [vmem:[#allocation11 + $0x1b4] sm:$0xf]
    %v524 = vld [vmem:[#allocation11 + $0x1b8] sm:$0xff]
    %v525 = vld [vmem:[#allocation11 + $0x1c0] sm:$0xff]
    %v526 = vld [vmem:[#allocation11 + $0x1c8] sm:$0xf]
    %v527 = vld [vmem:[#allocation11 + $0x1cc] sm:$0xff]
    %v528 = vld [vmem:[#allocation11 + $0x1d4] sm:$0xff]
    %v529 = vld [vmem:[#allocation11 + $0x1dc] sm:$0xf]
    %v530 = vld [vmem:[#allocation11 + $0x1e0] sm:$0xff]
    %v531 = vld [vmem:[#allocation11 + $0x1e8] sm:$0xff]
    %v532 = vld [vmem:[#allocation11 + $0x1f0] sm:$0xf]
    %v533 = vld [vmem:[#allocation11 + $0x1f4] sm:$0xff]
    %v534 = vld [vmem:[#allocation11 + $0x1fc] sm:$0xff]
    %v535 = vld [vmem:[#allocation11 + $0x204] sm:$0xf]
    %v536 = vld [vmem:[#allocation11 + $0x208] sm:$0xff]
    %v537 = vld [vmem:[#allocation11 + $0x210] sm:$0xff]
    %v538 = vld [vmem:[#allocation11 + $0x218] sm:$0xf]
    %v539 = vld [vmem:[#allocation11 + $0x21c] sm:$0xff]
    %v540 = vld [vmem:[#allocation11 + $0x224] sm:$0xff]
    %v541 = vld [vmem:[#allocation11 + $0x22c] sm:$0xf]
    %v542 = vld [vmem:[#allocation11 + $0x230] sm:$0xff]
    %v543 = vld [vmem:[#allocation11 + $0x238] sm:$0xff]
    %v544 = vld [vmem:[#allocation11 + $0x240] sm:$0xf]
    %v545 = vld [vmem:[#allocation11 + $0x244] sm:$0xff]
    %v546 = vld [vmem:[#allocation11 + $0x24c] sm:$0xff]
    %v547 = vld [vmem:[#allocation11 + $0x254] sm:$0xf]
    %v548 = vld [vmem:[#allocation11 + $0x258] sm:$0xff]
    %v549 = vld [vmem:[#allocation11 + $0x260] sm:$0xff]
    %v550 = vld [vmem:[#allocation11 + $0x268] sm:$0xf]
    %v551 = vld [vmem:[#allocation11 + $0x26c] sm:$0xff]
    %v552 = vld [vmem:[#allocation11 + $0x274] sm:$0xff]
    %v553 = vld [vmem:[#allocation11 + $0x27c] sm:$0xf]
    %v650 = vunpack.c.l.b16 %v458
    %v651 = vunpack.c.h.b16 %v458
    %v652 = vunpack.c.l.b16 %v459
    %v653 = vunpack.c.h.b16 %v459
    %v654 = vunpack.c.l.b16 %v460
    %v655 = vunpack.c.l.b16 %v461
    %v656 = vunpack.c.h.b16 %v461
    %v657 = vunpack.c.l.b16 %v462
    %v658 = vunpack.c.h.b16 %v462
    %v659 = vunpack.c.l.b16 %v463
    %v660 = vunpack.c.l.b16 %v464
    %v661 = vunpack.c.h.b16 %v464
    %v662 = vunpack.c.l.b16 %v465
    %v663 = vunpack.c.h.b16 %v465
    %v664 = vunpack.c.l.b16 %v466
    %v665 = vunpack.c.l.b16 %v467
    %v666 = vunpack.c.h.b16 %v467
    %v667 = vunpack.c.l.b16 %v468
    %v668 = vunpack.c.h.b16 %v468
    %v669 = vunpack.c.l.b16 %v469
    %v670 = vunpack.c.l.b16 %v470
    %v671 = vunpack.c.h.b16 %v470
    %v672 = vunpack.c.l.b16 %v471
    %v673 = vunpack.c.h.b16 %v471
    %v674 = vunpack.c.l.b16 %v472
    %v675 = vunpack.c.l.b16 %v473
    %v676 = vunpack.c.h.b16 %v473
    %v677 = vunpack.c.l.b16 %v474
    %v678 = vunpack.c.h.b16 %v474
    %v679 = vunpack.c.l.b16 %v475
    %v680 = vunpack.c.l.b16 %v476
    %v681 = vunpack.c.h.b16 %v476
    %v682 = vunpack.c.l.b16 %v477
    %v683 = vunpack.c.h.b16 %v477
    %v684 = vunpack.c.l.b16 %v478
    %v685 = vunpack.c.l.b16 %v479
    %v686 = vunpack.c.h.b16 %v479
    %v687 = vunpack.c.l.b16 %v480
    %v688 = vunpack.c.h.b16 %v480
    %v689 = vunpack.c.l.b16 %v481
    %v690 = vunpack.c.l.b16 %v482
    %v691 = vunpack.c.h.b16 %v482
    %v692 = vunpack.c.l.b16 %v483
    %v693 = vunpack.c.h.b16 %v483
    %v694 = vunpack.c.l.b16 %v484
    %v695 = vunpack.c.l.b16 %v485
    %v696 = vunpack.c.h.b16 %v485
    %v697 = vunpack.c.l.b16 %v486
    %v698 = vunpack.c.h.b16 %v486
    %v699 = vunpack.c.l.b16 %v487
    %v700 = vunpack.c.l.b16 %v488
    %v701 = vunpack.c.h.b16 %v488
    %v702 = vunpack.c.l.b16 %v489
    %v703 = vunpack.c.h.b16 %v489
    %v704 = vunpack.c.l.b16 %v490
    %v705 = vunpack.c.l.b16 %v491
    %v706 = vunpack.c.h.b16 %v491
    %v707 = vunpack.c.l.b16 %v492
    %v708 = vunpack.c.h.b16 %v492
    %v709 = vunpack.c.l.b16 %v493
    %v710 = vunpack.c.l.b16 %v494
    %v711 = vunpack.c.h.b16 %v494
    %v712 = vunpack.c.l.b16 %v495
    %v713 = vunpack.c.h.b16 %v495
    %v714 = vunpack.c.l.b16 %v496
    %v715 = vunpack.c.l.b16 %v497
    %v716 = vunpack.c.h.b16 %v497
    %v717 = vunpack.c.l.b16 %v498
    %v718 = vunpack.c.h.b16 %v498
    %v719 = vunpack.c.l.b16 %v499
    %v720 = vunpack.c.l.b16 %v500
    %v721 = vunpack.c.h.b16 %v500
    %v722 = vunpack.c.l.b16 %v501
    %v723 = vunpack.c.h.b16 %v501
    %v724 = vunpack.c.l.b16 %v502
    %v725 = vunpack.c.l.b16 %v503
    %v726 = vunpack.c.h.b16 %v503
    %v727 = vunpack.c.l.b16 %v504
    %v728 = vunpack.c.h.b16 %v504
    %v729 = vunpack.c.l.b16 %v505
    %v730 = vunpack.c.l.b16 %v506
    %v731 = vunpack.c.h.b16 %v506
    %v732 = vunpack.c.l.b16 %v507
    %v733 = vunpack.c.h.b16 %v507
    %v734 = vunpack.c.l.b16 %v508
    %v735 = vunpack.c.l.b16 %v509
    %v736 = vunpack.c.h.b16 %v509
    %v737 = vunpack.c.l.b16 %v510
    %v738 = vunpack.c.h.b16 %v510
    %v739 = vunpack.c.l.b16 %v511
    %v740 = vunpack.c.l.b16 %v512
    %v741 = vunpack.c.h.b16 %v512
    %v742 = vunpack.c.l.b16 %v513
    %v743 = vunpack.c.h.b16 %v513
    %v744 = vunpack.c.l.b16 %v514
    %v745 = vunpack.c.l.b16 %v515
    %v746 = vunpack.c.h.b16 %v515
    %v747 = vunpack.c.l.b16 %v516
    %v748 = vunpack.c.h.b16 %v516
    %v749 = vunpack.c.l.b16 %v517
    %v750 = vunpack.c.l.b16 %v518
    %v751 = vunpack.c.h.b16 %v518
    %v752 = vunpack.c.l.b16 %v519
    %v753 = vunpack.c.h.b16 %v519
    %v754 = vunpack.c.l.b16 %v520
    %v755 = vunpack.c.l.b16 %v521
    %v756 = vunpack.c.h.b16 %v521
    %v757 = vunpack.c.l.b16 %v522
    %v758 = vunpack.c.h.b16 %v522
    %v759 = vunpack.c.l.b16 %v523
    %v760 = vunpack.c.l.b16 %v524
    %v761 = vunpack.c.h.b16 %v524
    %v762 = vunpack.c.l.b16 %v525
    %v763 = vunpack.c.h.b16 %v525
    %v764 = vunpack.c.l.b16 %v526
    %v765 = vunpack.c.l.b16 %v527
    %v766 = vunpack.c.h.b16 %v527
    %v767 = vunpack.c.l.b16 %v528
    %v768 = vunpack.c.h.b16 %v528
    %v769 = vunpack.c.l.b16 %v529
    %v770 = vunpack.c.l.b16 %v530
    %v771 = vunpack.c.h.b16 %v530
    %v772 = vunpack.c.l.b16 %v531
    %v773 = vunpack.c.h.b16 %v531
    %v774 = vunpack.c.l.b16 %v532
    %v775 = vunpack.c.l.b16 %v533
    %v776 = vunpack.c.h.b16 %v533
    %v777 = vunpack.c.l.b16 %v534
    %v778 = vunpack.c.h.b16 %v534
    %v779 = vunpack.c.l.b16 %v535
    %v780 = vunpack.c.l.b16 %v536
    %v781 = vunpack.c.h.b16 %v536
    %v782 = vunpack.c.l.b16 %v537
    %v783 = vunpack.c.h.b16 %v537
    %v784 = vunpack.c.l.b16 %v538
    %v785 = vunpack.c.l.b16 %v539
    %v786 = vunpack.c.h.b16 %v539
    %v787 = vunpack.c.l.b16 %v540
    %v788 = vunpack.c.h.b16 %v540
    %v789 = vunpack.c.l.b16 %v541
    %v790 = vunpack.c.l.b16 %v542
    %v791 = vunpack.c.h.b16 %v542
    %v792 = vunpack.c.l.b16 %v543
    %v793 = vunpack.c.h.b16 %v543
    %v794 = vunpack.c.l.b16 %v544
    %v795 = vunpack.c.l.b16 %v545
    %v796 = vunpack.c.h.b16 %v545
    %v797 = vunpack.c.l.b16 %v546
    %v798 = vunpack.c.h.b16 %v546
    %v799 = vunpack.c.l.b16 %v547
    %v800 = vunpack.c.l.b16 %v548
    %v801 = vunpack.c.h.b16 %v548
    %v802 = vunpack.c.l.b16 %v549
    %v803 = vunpack.c.h.b16 %v549
    %v804 = vunpack.c.l.b16 %v550
    %v805 = vunpack.c.l.b16 %v551
    %v806 = vunpack.c.h.b16 %v551
    %v807 = vunpack.c.l.b16 %v552
    %v808 = vunpack.c.h.b16 %v552
    %v809 = vunpack.c.l.b16 %v553
    %v810 = vpack.c.b16 %v655, %v650
    %v811 = vpack.c.b16 %v656, %v651
    %v812 = vpack.c.b16 %v657, %v652
    %v813 = vpack.c.b16 %v658, %v653
    %v814 = vpack.c.b16 %v659, %v654
    %v815 = vpack.c.b16 %v665, %v660
    %v816 = vpack.c.b16 %v666, %v661
    %v817 = vpack.c.b16 %v667, %v662
    %v818 = vpack.c.b16 %v668, %v663
    %v819 = vpack.c.b16 %v669, %v664
    %v820 = vpack.c.b16 %v675, %v670
    %v821 = vpack.c.b16 %v676, %v671
    %v822 = vpack.c.b16 %v677, %v672
    %v823 = vpack.c.b16 %v678, %v673
    %v824 = vpack.c.b16 %v679, %v674
    %v825 = vpack.c.b16 %v685, %v680
    %v826 = vpack.c.b16 %v686, %v681
    %v827 = vpack.c.b16 %v687, %v682
    %v828 = vpack.c.b16 %v688, %v683
    %v829 = vpack.c.b16 %v689, %v684
    %v830 = vpack.c.b16 %v695, %v690
    %v831 = vpack.c.b16 %v696, %v691
    %v832 = vpack.c.b16 %v697, %v692
    %v833 = vpack.c.b16 %v698, %v693
    %v834 = vpack.c.b16 %v699, %v694
    %v835 = vpack.c.b16 %v705, %v700
    %v836 = vpack.c.b16 %v706, %v701
    %v837 = vpack.c.b16 %v707, %v702
    %v838 = vpack.c.b16 %v708, %v703
    %v839 = vpack.c.b16 %v709, %v704
    %v840 = vpack.c.b16 %v715, %v710
    %v841 = vpack.c.b16 %v716, %v711
    %v842 = vpack.c.b16 %v717, %v712
    %v843 = vpack.c.b16 %v718, %v713
    %v844 = vpack.c.b16 %v719, %v714
    %v845 = vpack.c.b16 %v725, %v720
    %v846 = vpack.c.b16 %v726, %v721
    %v847 = vpack.c.b16 %v727, %v722
    %v848 = vpack.c.b16 %v728, %v723
    %v849 = vpack.c.b16 %v729, %v724
    %v850 = vpack.c.b16 %v735, %v730
    %v851 = vpack.c.b16 %v736, %v731
    %v852 = vpack.c.b16 %v737, %v732
    %v853 = vpack.c.b16 %v738, %v733
    %v854 = vpack.c.b16 %v739, %v734
    %v855 = vpack.c.b16 %v745, %v740
    %v856 = vpack.c.b16 %v746, %v741
    %v857 = vpack.c.b16 %v747, %v742
    %v858 = vpack.c.b16 %v748, %v743
    %v859 = vpack.c.b16 %v749, %v744
    %v860 = vpack.c.b16 %v755, %v750
    %v861 = vpack.c.b16 %v756, %v751
    %v862 = vpack.c.b16 %v757, %v752
    %v863 = vpack.c.b16 %v758, %v753
    %v864 = vpack.c.b16 %v759, %v754
    %v865 = vpack.c.b16 %v765, %v760
    %v866 = vpack.c.b16 %v766, %v761
    %v867 = vpack.c.b16 %v767, %v762
    %v868 = vpack.c.b16 %v768, %v763
    %v869 = vpack.c.b16 %v769, %v764
    %v870 = vpack.c.b16 %v775, %v770
    %v871 = vpack.c.b16 %v776, %v771
    %v872 = vpack.c.b16 %v777, %v772
    %v873 = vpack.c.b16 %v778, %v773
    %v874 = vpack.c.b16 %v779, %v774
    %v875 = vpack.c.b16 %v785, %v780
    %v876 = vpack.c.b16 %v786, %v781
    %v877 = vpack.c.b16 %v787, %v782
    %v878 = vpack.c.b16 %v788, %v783
    %v879 = vpack.c.b16 %v789, %v784
    %v880 = vpack.c.b16 %v795, %v790
    %v881 = vpack.c.b16 %v796, %v791
    %v882 = vpack.c.b16 %v797, %v792
    %v883 = vpack.c.b16 %v798, %v793
    %v884 = vpack.c.b16 %v799, %v794
    %v885 = vpack.c.b16 %v805, %v800
    %v886 = vpack.c.b16 %v806, %v801
    %v887 = vpack.c.b16 %v807, %v802
    %v888 = vpack.c.b16 %v808, %v803
    %v889 = vpack.c.b16 %v809, %v804
    %970 = vmatpush.bf16.msra.mxu0 %v845
    %971 = vmatpush.bf16.msra.mxu0 %v840
    %972 = vmatpush.bf16.msra.mxu0 %v835
    %973 = vmatpush.bf16.msra.mxu0 %v830
    %974 = vmatpush.bf16.msra.mxu0 %v825
    %975 = vmatpush.bf16.msra.mxu0 %v820
    %976 = vmatpush.bf16.msra.mxu0 %v815
    %977 = vmatpush.bf16.msra.mxu0 %v810
    %978 = vmatmul.bf16.gmra.mxu0 %v456
    %v979 = vpop.f32.mrf.mxu0
    %v980 = vadd.f32 0.0, %v979
    %v981 = vpop.f32.mrf.mxu0
    %982 = vdwg.mxu0
    %983 = vmatpush.bf16.msra.mxu0 %v885
    %984 = vmatpush.bf16.msra.mxu0 %v880
    %985 = vmatpush.bf16.msra.mxu0 %v875
    %986 = vmatpush.bf16.msra.mxu0 %v870
    %987 = vmatpush.bf16.msra.mxu0 %v865
    %988 = vmatpush.bf16.msra.mxu0 %v860
    %989 = vmatpush.bf16.msra.mxu0 %v855
    %990 = vmatpush.bf16.msra.mxu0 %v850
    %991 = vmatmul.bf16.gmra.mxu0 %v457
    %v992 = vpop.f32.mrf.mxu0
    %v993 = vadd.f32 %v980, %v992
    %v994 = vpop.f32.mrf.mxu0
    %995 = vdwg.mxu0
    %996 = vmatpush.bf16.msra.mxu0 %v846
    %997 = vmatpush.bf16.msra.mxu0 %v841
    %998 = vmatpush.bf16.msra.mxu0 %v836
    %999 = vmatpush.bf16.msra.mxu0 %v831
    %1000 = vmatpush.bf16.msra.mxu0 %v826
    %1001 = vmatpush.bf16.msra.mxu0 %v821
    %1002 = vmatpush.bf16.msra.mxu0 %v816
    %1003 = vmatpush.bf16.msra.mxu0 %v811
    %1004 = vmatmul.bf16.gmra.mxu0 %v456
    %v1005 = vpop.f32.mrf.mxu0
    %v1006 = vadd.f32 0.0, %v1005
    %v1007 = vpop.f32.mrf.mxu0
    %1008 = vdwg.mxu0
    %1009 = vmatpush.bf16.msra.mxu0 %v886
    %1010 = vmatpush.bf16.msra.mxu0 %v881
    %1011 = vmatpush.bf16.msra.mxu0 %v876
    %1012 = vmatpush.bf16.msra.mxu0 %v871
    %1013 = vmatpush.bf16.msra.mxu0 %v866
    %1014 = vmatpush.bf16.msra.mxu0 %v861
    %1015 = vmatpush.bf16.msra.mxu0 %v856
    %1016 = vmatpush.bf16.msra.mxu0 %v851
    %1017 = vmatmul.bf16.gmra.mxu0 %v457
    %v1018 = vpop.f32.mrf.mxu0
    %v1019 = vadd.f32 %v1006, %v1018
    %v1020 = vpop.f32.mrf.mxu0
    %1021 = vdwg.mxu0
    %1022 = vmatpush.bf16.msra.mxu0 %v847
    %1023 = vmatpush.bf16.msra.mxu0 %v842
    %1024 = vmatpush.bf16.msra.mxu0 %v837
    %1025 = vmatpush.bf16.msra.mxu0 %v832
    %1026 = vmatpush.bf16.msra.mxu0 %v827
    %1027 = vmatpush.bf16.msra.mxu0 %v822
    %1028 = vmatpush.bf16.msra.mxu0 %v817
    %1029 = vmatpush.bf16.msra.mxu0 %v812
    %1030 = vmatmul.bf16.gmra.mxu0 %v456
    %v1031 = vpop.f32.mrf.mxu0
    %v1032 = vadd.f32 0.0, %v1031
    %v1033 = vpop.f32.mrf.mxu0
    %1034 = vdwg.mxu0
    %1035 = vmatpush.bf16.msra.mxu0 %v887
    %1036 = vmatpush.bf16.msra.mxu0 %v882
    %1037 = vmatpush.bf16.msra.mxu0 %v877
    %1038 = vmatpush.bf16.msra.mxu0 %v872
    %1039 = vmatpush.bf16.msra.mxu0 %v867
    %1040 = vmatpush.bf16.msra.mxu0 %v862
    %1041 = vmatpush.bf16.msra.mxu0 %v857
    %1042 = vmatpush.bf16.msra.mxu0 %v852
    %1043 = vmatmul.bf16.gmra.mxu0 %v457
    %v1044 = vpop.f32.mrf.mxu0
    %v1045 = vadd.f32 %v1032, %v1044
    %v1046 = vpop.f32.mrf.mxu0
    %1047 = vdwg.mxu0
    %1048 = vmatpush.bf16.msra.mxu0 %v848
    %1049 = vmatpush.bf16.msra.mxu0 %v843
    %1050 = vmatpush.bf16.msra.mxu0 %v838
    %1051 = vmatpush.bf16.msra.mxu0 %v833
    %1052 = vmatpush.bf16.msra.mxu0 %v828
    %1053 = vmatpush.bf16.msra.mxu0 %v823
    %1054 = vmatpush.bf16.msra.mxu0 %v818
    %1055 = vmatpush.bf16.msra.mxu0 %v813
    %1056 = vmatmul.bf16.gmra.mxu0 %v456
    %v1057 = vpop.f32.mrf.mxu0
    %v1058 = vadd.f32 0.0, %v1057
    %v1059 = vpop.f32.mrf.mxu0
    %1060 = vdwg.mxu0
    %1061 = vmatpush.bf16.msra.mxu0 %v888
    %1062 = vmatpush.bf16.msra.mxu0 %v883
    %1063 = vmatpush.bf16.msra.mxu0 %v878
    %1064 = vmatpush.bf16.msra.mxu0 %v873
    %1065 = vmatpush.bf16.msra.mxu0 %v868
    %1066 = vmatpush.bf16.msra.mxu0 %v863
    %1067 = vmatpush.bf16.msra.mxu0 %v858
    %1068 = vmatpush.bf16.msra.mxu0 %v853
    %1069 = vmatmul.bf16.gmra.mxu0 %v457
    %v1070 = vpop.f32.mrf.mxu0
    %v1071 = vadd.f32 %v1058, %v1070
    %v1072 = vpop.f32.mrf.mxu0
    %1073 = vdwg.mxu0
    %1074 = vmatpush.bf16.msra.mxu0 %v849
    %1075 = vmatpush.bf16.msra.mxu0 %v844
    %1076 = vmatpush.bf16.msra.mxu0 %v839
    %1077 = vmatpush.bf16.msra.mxu0 %v834
    %1078 = vmatpush.bf16.msra.mxu0 %v829
    %1079 = vmatpush.bf16.msra.mxu0 %v824
    %1080 = vmatpush.bf16.msra.mxu0 %v819
    %1081 = vmatpush.bf16.msra.mxu0 %v814
    %1082 = vmatmul.bf16.gmra.mxu0 %v456
    %v1083 = vpop.f32.mrf.mxu0
    %v1084 = vadd.f32 0.0, %v1083
    %v1085 = vpop.f32.mrf.mxu0
    %1086 = vdwg.mxu0
    %1087 = vmatpush.bf16.msra.mxu0 %v889
    %1088 = vmatpush.bf16.msra.mxu0 %v884
    %1089 = vmatpush.bf16.msra.mxu0 %v879
    %1090 = vmatpush.bf16.msra.mxu0 %v874
    %1091 = vmatpush.bf16.msra.mxu0 %v869
    %1092 = vmatpush.bf16.msra.mxu0 %v864
    %1093 = vmatpush.bf16.msra.mxu0 %v859
    %1094 = vmatpush.bf16.msra.mxu0 %v854
    %1095 = vmatmul.bf16.gmra.mxu0 %v457
    %v1096 = vpop.f32.mrf.mxu0
    %v1097 = vadd.f32 %v1084, %v1096
    %v1098 = vpop.f32.mrf.mxu0
    %1099 = vdwg.mxu0
    %v1100 = vld [vmem:[%s6] sm:$0xf]
    %v1102 = vperm.slane %v1100, 0
    %v1103 = vperm.slane %v1100, 1
    %v1104 = vperm.slane %v1100, 2
    %v1105 = vperm.slane %v1100, 3
    %v1110 = vadd.f32 %v993, %v1102
    %v1111 = vadd.f32 %v1019, %v1103
    %v1112 = vadd.f32 %v1045, %v1104
    %v1113 = vadd.f32 %v1071, %v1105
    %v1114 = vmax.f32 %v1110, 0.0
    %v1115 = vmax.f32 %v1111, 0.0
    %v1116 = vmax.f32 %v1112, 0.0
    %v1117 = vmax.f32 %v1113, 0.0
    %v1118 = vpack.c.bf16 %v1114, %v1114
    %v1119 = vpack.c.bf16 %v1115, %v1115
    %v1120 = vpack.c.bf16 %v1116, %v1116
    %v1121 = vpack.c.bf16 %v1117, %v1117
    %v1122 = vld [vmem:[#allocation13] sm:$0xf]
    %v1123 = vld [vmem:[#allocation13 + $0x4] sm:$0xf]
    %v1124 = vld [vmem:[#allocation13 + $0x8] sm:$0xf]
    %v1125 = vld [vmem:[#allocation13 + $0xc] sm:$0xf]
    %v1126 = vld [vmem:[#allocation13 + $0x10] sm:$0xf]
    %v1127 = vld [vmem:[#allocation13 + $0x14] sm:$0xf]
    %v1128 = vld [vmem:[#allocation13 + $0x18] sm:$0xf]
    %v1129 = vld [vmem:[#allocation13 + $0x1c] sm:$0xf]
    %v1130 = vld [vmem:[#allocation13 + $0x20] sm:$0xf]
    %v1131 = vld [vmem:[#allocation13 + $0x24] sm:$0xf]
    %v1132 = vld [vmem:[#allocation13 + $0x28] sm:$0xf]
    %v1133 = vld [vmem:[#allocation13 + $0x2c] sm:$0xf]
    %v1134 = vld [vmem:[#allocation13 + $0x30] sm:$0xf]
    %v1135 = vld [vmem:[#allocation13 + $0x34] sm:$0xf]
    %v1136 = vld [vmem:[#allocation13 + $0x38] sm:$0xf]
    %v1137 = vld [vmem:[#allocation13 + $0x3c] sm:$0xf]
    %v1138 = vld [vmem:[#allocation13 + $0x40] sm:$0xf]
    %v1139 = vld [vmem:[#allocation13 + $0x44] sm:$0xf]
    %v1140 = vld [vmem:[#allocation13 + $0x48] sm:$0xf]
    %v1141 = vld [vmem:[#allocation13 + $0x4c] sm:$0xf]
    %v1142 = vld [vmem:[#allocation13 + $0x50] sm:$0xf]
    %v1143 = vld [vmem:[#allocation13 + $0x54] sm:$0xf]
    %v1144 = vld [vmem:[#allocation13 + $0x58] sm:$0xf]
    %v1145 = vld [vmem:[#allocation13 + $0x5c] sm:$0xf]
    %v1146 = vld [vmem:[#allocation13 + $0x60] sm:$0xf]
    %v1147 = vld [vmem:[#allocation13 + $0x64] sm:$0xf]
    %v1148 = vld [vmem:[#allocation13 + $0x68] sm:$0xf]
    %v1149 = vld [vmem:[#allocation13 + $0x6c] sm:$0xf]
    %v1150 = vld [vmem:[#allocation13 + $0x70] sm:$0xf]
    %v1151 = vld [vmem:[#allocation13 + $0x74] sm:$0xf]
    %v1152 = vld [vmem:[#allocation13 + $0x78] sm:$0xf]
    %v1153 = vld [vmem:[#allocation13 + $0x7c] sm:$0xf]
    %v1154 = vld [vmem:[#allocation13 + $0x80] sm:$0xf]
    %v1155 = vld [vmem:[#allocation13 + $0x84] sm:$0xf]
    %v1156 = vld [vmem:[#allocation13 + $0x88] sm:$0xf]
    %v1157 = vld [vmem:[#allocation13 + $0x8c] sm:$0xf]
    %v1158 = vld [vmem:[#allocation13 + $0x90] sm:$0xf]
    %v1159 = vld [vmem:[#allocation13 + $0x94] sm:$0xf]
    %v1160 = vld [vmem:[#allocation13 + $0x98] sm:$0xf]
    %v1161 = vld [vmem:[#allocation13 + $0x9c] sm:$0xf]
    %v1162 = vld [vmem:[#allocation13 + $0xa0] sm:$0xf]
    %v1163 = vld [vmem:[#allocation13 + $0xa4] sm:$0xf]
    %v1164 = vld [vmem:[#allocation13 + $0xa8] sm:$0xf]
    %v1165 = vld [vmem:[#allocation13 + $0xac] sm:$0xf]
    %v1166 = vld [vmem:[#allocation13 + $0xb0] sm:$0xf]
    %v1167 = vld [vmem:[#allocation13 + $0xb4] sm:$0xf]
    %v1168 = vld [vmem:[#allocation13 + $0xb8] sm:$0xf]
    %v1169 = vld [vmem:[#allocation13 + $0xbc] sm:$0xf]
    %v1170 = vld [vmem:[#allocation13 + $0xc0] sm:$0xf]
    %v1171 = vld [vmem:[#allocation13 + $0xc4] sm:$0xf]
    %v1172 = vld [vmem:[#allocation13 + $0xc8] sm:$0xf]
    %v1173 = vld [vmem:[#allocation13 + $0xcc] sm:$0xf]
    %v1174 = vld [vmem:[#allocation13 + $0xd0] sm:$0xf]
    %v1175 = vld [vmem:[#allocation13 + $0xd4] sm:$0xf]
    %v1176 = vld [vmem:[#allocation13 + $0xd8] sm:$0xf]
    %v1177 = vld [vmem:[#allocation13 + $0xdc] sm:$0xf]
    %v1178 = vld [vmem:[#allocation13 + $0xe0] sm:$0xf]
    %v1179 = vld [vmem:[#allocation13 + $0xe4] sm:$0xf]
    %v1180 = vld [vmem:[#allocation13 + $0xe8] sm:$0xf]
    %v1181 = vld [vmem:[#allocation13 + $0xec] sm:$0xf]
    %v1182 = vld [vmem:[#allocation13 + $0xf0] sm:$0xf]
    %v1183 = vld [vmem:[#allocation13 + $0xf4] sm:$0xf]
    %v1184 = vld [vmem:[#allocation13 + $0xf8] sm:$0xf]
    %v1185 = vld [vmem:[#allocation13 + $0xfc] sm:$0xf]
    %v1250 = vunpack.c.l.b16 %v1122
    %v1251 = vunpack.c.l.b16 %v1123
    %v1252 = vunpack.c.l.b16 %v1124
    %v1253 = vunpack.c.l.b16 %v1125
    %v1254 = vunpack.c.l.b16 %v1126
    %v1255 = vunpack.c.l.b16 %v1127
    %v1256 = vunpack.c.l.b16 %v1128
    %v1257 = vunpack.c.l.b16 %v1129
    %v1258 = vunpack.c.l.b16 %v1130
    %v1259 = vunpack.c.l.b16 %v1131
    %v1260 = vunpack.c.l.b16 %v1132
    %v1261 = vunpack.c.l.b16 %v1133
    %v1262 = vunpack.c.l.b16 %v1134
    %v1263 = vunpack.c.l.b16 %v1135
    %v1264 = vunpack.c.l.b16 %v1136
    %v1265 = vunpack.c.l.b16 %v1137
    %v1266 = vunpack.c.l.b16 %v1138
    %v1267 = vunpack.c.l.b16 %v1139
    %v1268 = vunpack.c.l.b16 %v1140
    %v1269 = vunpack.c.l.b16 %v1141
    %v1270 = vunpack.c.l.b16 %v1142
    %v1271 = vunpack.c.l.b16 %v1143
    %v1272 = vunpack.c.l.b16 %v1144
    %v1273 = vunpack.c.l.b16 %v1145
    %v1274 = vunpack.c.l.b16 %v1146
    %v1275 = vunpack.c.l.b16 %v1147
    %v1276 = vunpack.c.l.b16 %v1148
    %v1277 = vunpack.c.l.b16 %v1149
    %v1278 = vunpack.c.l.b16 %v1150
    %v1279 = vunpack.c.l.b16 %v1151
    %v1280 = vunpack.c.l.b16 %v1152
    %v1281 = vunpack.c.l.b16 %v1153
    %v1282 = vunpack.c.l.b16 %v1154
    %v1283 = vunpack.c.l.b16 %v1155
    %v1284 = vunpack.c.l.b16 %v1156
    %v1285 = vunpack.c.l.b16 %v1157
    %v1286 = vunpack.c.l.b16 %v1158
    %v1287 = vunpack.c.l.b16 %v1159
    %v1288 = vunpack.c.l.b16 %v1160
    %v1289 = vunpack.c.l.b16 %v1161
    %v1290 = vunpack.c.l.b16 %v1162
    %v1291 = vunpack.c.l.b16 %v1163
    %v1292 = vunpack.c.l.b16 %v1164
    %v1293 = vunpack.c.l.b16 %v1165
    %v1294 = vunpack.c.l.b16 %v1166
    %v1295 = vunpack.c.l.b16 %v1167
    %v1296 = vunpack.c.l.b16 %v1168
    %v1297 = vunpack.c.l.b16 %v1169
    %v1298 = vunpack.c.l.b16 %v1170
    %v1299 = vunpack.c.l.b16 %v1171
    %v1300 = vunpack.c.l.b16 %v1172
    %v1301 = vunpack.c.l.b16 %v1173
    %v1302 = vunpack.c.l.b16 %v1174
    %v1303 = vunpack.c.l.b16 %v1175
    %v1304 = vunpack.c.l.b16 %v1176
    %v1305 = vunpack.c.l.b16 %v1177
    %v1306 = vunpack.c.l.b16 %v1178
    %v1307 = vunpack.c.l.b16 %v1179
    %v1308 = vunpack.c.l.b16 %v1180
    %v1309 = vunpack.c.l.b16 %v1181
    %v1310 = vunpack.c.l.b16 %v1182
    %v1311 = vunpack.c.l.b16 %v1183
    %v1312 = vunpack.c.l.b16 %v1184
    %v1313 = vunpack.c.l.b16 %v1185
    %v1314 = vpack.c.b16 %v1251, %v1250
    %v1315 = vpack.c.b16 %v1253, %v1252
    %v1316 = vpack.c.b16 %v1255, %v1254
    %v1317 = vpack.c.b16 %v1257, %v1256
    %v1318 = vpack.c.b16 %v1259, %v1258
    %v1319 = vpack.c.b16 %v1261, %v1260
    %v1320 = vpack.c.b16 %v1263, %v1262
    %v1321 = vpack.c.b16 %v1265, %v1264
    %v1322 = vpack.c.b16 %v1267, %v1266
    %v1323 = vpack.c.b16 %v1269, %v1268
    %v1324 = vpack.c.b16 %v1271, %v1270
    %v1325 = vpack.c.b16 %v1273, %v1272
    %v1326 = vpack.c.b16 %v1275, %v1274
    %v1327 = vpack.c.b16 %v1277, %v1276
    %v1328 = vpack.c.b16 %v1279, %v1278
    %v1329 = vpack.c.b16 %v1281, %v1280
    %v1330 = vpack.c.b16 %v1283, %v1282
    %v1331 = vpack.c.b16 %v1285, %v1284
    %v1332 = vpack.c.b16 %v1287, %v1286
    %v1333 = vpack.c.b16 %v1289, %v1288
    %v1334 = vpack.c.b16 %v1291, %v1290
    %v1335 = vpack.c.b16 %v1293, %v1292
    %v1336 = vpack.c.b16 %v1295, %v1294
    %v1337 = vpack.c.b16 %v1297, %v1296
    %v1338 = vpack.c.b16 %v1299, %v1298
    %v1339 = vpack.c.b16 %v1301, %v1300
    %v1340 = vpack.c.b16 %v1303, %v1302
    %v1341 = vpack.c.b16 %v1305, %v1304
    %v1342 = vpack.c.b16 %v1307, %v1306
    %v1343 = vpack.c.b16 %v1309, %v1308
    %v1344 = vpack.c.b16 %v1311, %v1310
    %v1345 = vpack.c.b16 %v1313, %v1312
    %1378 = vmatpush.bf16.msra.mxu0 %v1321
    %1379 = vmatpush.bf16.msra.mxu0 %v1320
    %1380 = vmatpush.bf16.msra.mxu0 %v1319
    %1381 = vmatpush.bf16.msra.mxu0 %v1318
    %1382 = vmatpush.bf16.msra.mxu0 %v1317
    %1383 = vmatpush.bf16.msra.mxu0 %v1316
    %1384 = vmatpush.bf16.msra.mxu0 %v1315
    %1385 = vmatpush.bf16.msra.mxu0 %v1314
    %1386 = vmatmul.bf16.gmra.mxu0 %v1118
    %v1387 = vpop.f32.mrf.mxu0
    %v1388 = vadd.f32 %v1097, %v1387
    %v1389 = vpop.f32.mrf.mxu0
    %1390 = vdwg.mxu0
    %1391 = vmatpush.bf16.msra.mxu0 %v1329
    %1392 = vmatpush.bf16.msra.mxu0 %v1328
    %1393 = vmatpush.bf16.msra.mxu0 %v1327
    %1394 = vmatpush.bf16.msra.mxu0 %v1326
    %1395 = vmatpush.bf16.msra.mxu0 %v1325
    %1396 = vmatpush.bf16.msra.mxu0 %v1324
    %1397 = vmatpush.bf16.msra.mxu0 %v1323
    %1398 = vmatpush.bf16.msra.mxu0 %v1322
    %1399 = vmatmul.bf16.gmra.mxu0 %v1119
    %v1400 = vpop.f32.mrf.mxu0
    %v1401 = vadd.f32 %v1388, %v1400
    %v1402 = vpop.f32.mrf.mxu0
    %1403 = vdwg.mxu0
    %1404 = vmatpush.bf16.msra.mxu0 %v1337
    %1405 = vmatpush.bf16.msra.mxu0 %v1336
    %1406 = vmatpush.bf16.msra.mxu0 %v1335
    %1407 = vmatpush.bf16.msra.mxu0 %v1334
    %1408 = vmatpush.bf16.msra.mxu0 %v1333
    %1409 = vmatpush.bf16.msra.mxu0 %v1332
    %1410 = vmatpush.bf16.msra.mxu0 %v1331
    %1411 = vmatpush.bf16.msra.mxu0 %v1330
    %1412 = vmatmul.bf16.gmra.mxu0 %v1120
    %v1413 = vpop.f32.mrf.mxu0
    %v1414 = vadd.f32 %v1401, %v1413
    %v1415 = vpop.f32.mrf.mxu0
    %1416 = vdwg.mxu0
    %1417 = vmatpush.bf16.msra.mxu0 %v1345
    %1418 = vmatpush.bf16.msra.mxu0 %v1344
    %1419 = vmatpush.bf16.msra.mxu0 %v1343
    %1420 = vmatpush.bf16.msra.mxu0 %v1342
    %1421 = vmatpush.bf16.msra.mxu0 %v1341
    %1422 = vmatpush.bf16.msra.mxu0 %v1340
    %1423 = vmatpush.bf16.msra.mxu0 %v1339
    %1424 = vmatpush.bf16.msra.mxu0 %v1338
    %1425 = vmatmul.bf16.gmra.mxu0 %v1121
    %v1426 = vpop.f32.mrf.mxu0
    %v1427 = vadd.f32 %v1414, %v1426
    %v1428 = vpop.f32.mrf.mxu0
    %1429 = vdwg.mxu0
    %v1430 = vld [vmem:[%s8] sm:$0x1]
    %v1432 = vperm.slane %v1430, 0
    %v1434 = vadd.f32 %v1427, %v1432
    %1435 = vst [vmem:[#allocation14] sm:$0xff] %v454
    %1436 = vst [vmem:[#allocation14 + $0x8] sm:$0xff] %v455
    %1437 = vst [vmem:[#allocation14 + $0x10] sm:$0xff] %v1434
    // Predicated region
    $region66: #{tpu_custom_call.1} parent=1 // pred_check
      _
    $region67: #{tpu_custom_call.1} parent=1 // pred_check_branch
      %1439 = sbr.rel (0) target = $region69
    $region68: #{tpu_custom_call.1} parent=1 // pred_region
      %1441 = vsyncadd [#allocation4], 0
      %s1443 = sshll.u32 [#allocation14], 4
      %s1444 = int_to_ptr.vmem [resolvable:$true] %s1443
      %s1445 = sshll.u32 %s9, 4
      %s1446 = int_to_ptr.hbm [resolvable:$true] %s1445
      %1448 = dma.vmem_to_hbm [thread:$0]  %s1444, 384, %s1446, [#allocation4]
    $region69: #{tpu_custom_call.1} parent=1 // pred_fallthru
      _
    // Predicated region
    $region70: #{tpu_custom_call.1} parent=1 // pred_check
      _
    $region71: #{tpu_custom_call.1} parent=1 // pred_check_branch
      %1450 = sbr.rel (0) target = $region73
    $region72: #{tpu_custom_call.1} parent=1 // pred_region
      %1452 = dma.done [#allocation4], 384
    $region73: #{tpu_custom_call.1} parent=1 // pred_fallthru
      _
    %1453 = vsyncpa [#allocation3], 1
    %1454 = vsyncpa [#allocation6], 1
    %1455 = vsyncpa [#allocation9], 1
    %1456 = vsyncpa [#allocation12], 1
    %1457 = vsyncpa [#allocation4], 1

</llo_original>
